<compile_context>
chip_gen: v7x
topology: tpu7x:2x2x1
jax: 0.10.0
libtpu: 0.0.40
codegen_flags: <defaults>
</compile_context>

<pallas_src>
import jax
import jax.numpy as jnp
from jax.experimental import pallas as pl
from jax.experimental.pallas import tpu as pltpu


# ----------------------------------------------------------------------------- kernel
def rgb_prediction_kernel(
    parent_ref,   # [B, 64]   f32
    child_ref,    # [B, 64]   f32
    poly_ref,     # [B, 16]   f32 (polygon features zero-padded 10 -> 16)
    w256_ref,     # [176,256] bf16: rows 0:64 pw1 | 64:128 cw1 | 128:160 gw2 | 160:176 gw1 (cols 0:32)
    w128_ref,     # [896,128] bf16: rows 0:256 pw2 | 256:512 cw2 | 512:768 gw3 | 768:896 head (cols 0:9)
    b_ref,        # [8, 256]  f32 : pb1,cb1,gb2,pb2,cb2,gb3,headbias,(gb1|nw)
    out_ref,      # [B, 3]    f32
):
    B = parent_ref.shape[0]
    bf16 = jnp.bfloat16
    f32 = jnp.float32

    def dot_bf16(x, w):
        return jnp.dot(x.astype(bf16), w, preferred_element_type=f32)

    def relu(v):
        return jnp.maximum(v, 0.0)

    def sigmoid(v):                       # exact logistic via a single EUP tanh
        return 0.5 * jnp.tanh(0.5 * v) + 0.5

    # ---- carve packed weights (static views of the slabs, no extra DMA) ----
    w1  = w256_ref[0:160, :]              # [160,256] fused layer-1 (pw1|cw1|gw2 along K)
    gw1 = w256_ref[160:176, 0:32]         # [16, 32]  poly front layer (rows 10:16 zero)
    w2  = w128_ref[0:768, :]              # [768,128] fused layer-2 (pw2|cw2|gw3 along K)
    wh  = w128_ref[768:896, 0:16]         # [128,16]  fused head (cols 0:3 p, 3:6 c, 6:9 g)

    # ---- biases / scalars ----
    pb1 = b_ref[0:1, 0:256]
    cb1 = b_ref[1:2, 0:256]
    gb2 = b_ref[2:3, 0:256]
    pb2 = b_ref[3:4, 0:128]
    cb2 = b_ref[4:5, 0:128]
    gb3 = b_ref[5:6, 0:128]
    hb  = b_ref[6:7, 0:16]                # pb3 | cb3 | gb4 in cols 0:9 (9:16 zero)
    gb1 = b_ref[7:8, 0:32]
    nw_p = b_ref[7:8, 32:33]              # softmax(comb)[parent]  * 255
    nw_g = b_ref[7:8, 33:34]              # softmax(comb)[polygon] * 255
    nw_c = b_ref[7:8, 34:35]              # softmax(comb)[child]   * 255

    # ---- polygon pathway front layer (dot #1) ----
    g1 = relu(dot_bf16(poly_ref[...], gw1) + gb1)                    # [B, 32]

    # ---- fused layer 1: row-stacked block-diagonal activation (dot #2) ----
    z64 = jnp.zeros((B, 64), f32)
    z32 = jnp.zeros((B, 32), f32)
    x1 = jnp.concatenate([
        jnp.concatenate([parent_ref[...], z64, z32], axis=1),        # parent rows -> K cols 0:64
        jnp.concatenate([z64, child_ref[...], z32], axis=1),         # child  rows -> K cols 64:128
        jnp.concatenate([z64, z64, g1], axis=1),                     # poly   rows -> K cols 128:160
    ], axis=0)                                                       # [3B, 160]
    b1 = jnp.concatenate([
        jnp.broadcast_to(pb1, (B, 256)),
        jnp.broadcast_to(cb1, (B, 256)),
        jnp.broadcast_to(gb2, (B, 256)),
    ], axis=0)                                                       # [3B, 256]
    h1 = relu(dot_bf16(x1, w1) + b1)                                 # [3B, 256]

    # ---- fused layer 2: row-stacked block-diagonal activation (dot #3) ----
    z256 = jnp.zeros((B, 256), f32)
    x2 = jnp.concatenate([
        jnp.concatenate([h1[0:B],       z256,          z256], axis=1),
        jnp.concatenate([z256,          h1[B:2 * B],   z256], axis=1),
        jnp.concatenate([z256,          z256,          h1[2 * B:3 * B]], axis=1),
    ], axis=0)                                                       # [3B, 768] (128-lane aligned blocks)
    b2 = jnp.concatenate([
        jnp.broadcast_to(pb2, (B, 128)),
        jnp.broadcast_to(cb2, (B, 128)),
        jnp.broadcast_to(gb3, (B, 128)),
    ], axis=0)                                                       # [3B, 128]
    h2 = relu(dot_bf16(x2, w2) + b2)                                 # [3B, 128]

    # ---- fused output head: shared K, per-pathway output columns (dot #4) ----
    # wrong-pathway columns / biases are computed but never read for that row block.
    head = sigmoid(dot_bf16(h2, wh) + hb)                            # [3B, 16]

    # ---- weighted combine with precomputed softmax*255 scalars ----
    out_ref[...] = (head[0:B, 0:3] * nw_p
                    + head[2 * B:3 * B, 6:9] * nw_g
                    + head[B:2 * B, 3:6] * nw_c)


# ----------------------------------------------------------------------------- params
def make_raw_params(key, text_embed_dim, poly_feature_dim=10,
                    hidden_dims=(256, 128), output_dim=3):
    """torch.nn.Linear-style init (uniform(+-1/sqrt(fan_in))). Weights stored [in, out]."""
    def linear(k, fan_in, fan_out):
        kw, kb = jax.random.split(k)
        bound = 1.0 / jnp.sqrt(fan_in)
        w = jax.random.uniform(kw, (fan_in, fan_out), jnp.float32, -bound, bound)
        b = jax.random.uniform(kb, (fan_out,), jnp.float32, -bound, bound)
        return w, b

    keys = jax.random.split(key, 10)
    h0, h1 = hidden_dims
    poly_hidden = 32

    pw1, pb1 = linear(keys[0], text_embed_dim, h0)
    pw2, pb2 = linear(keys[1], h0, h1)
    pw3, pb3 = linear(keys[2], h1, output_dim)

    gw1, gb1 = linear(keys[3], poly_feature_dim, poly_hidden)
    gw2, gb2 = linear(keys[4], poly_hidden, h0)
    gw3, gb3 = linear(keys[5], h0, h1)
    gw4, gb4 = linear(keys[6], h1, output_dim)

    cw1, cb1 = linear(keys[7], text_embed_dim, h0)
    cw2, cb2 = linear(keys[8], h0, h1)
    cw3, cb3 = linear(keys[9], h1, output_dim)

    comb = jnp.array([1.0, 1.0, 4.0], dtype=jnp.float32)

    return (pw1, pb1, pw2, pb2, pw3, pb3,
            gw1, gb1, gw2, gb2, gw3, gb3, gw4, gb4,
            cw1, cb1, cw2, cb2, cw3, cb3, comb)


def pack_params(raw):
    """Pack the 21 parameter arrays into 3 contiguous buffers (combine softmax pre-folded)."""
    (pw1, pb1, pw2, pb2, pw3, pb3,
     gw1, gb1, gw2, gb2, gw3, gb3, gw4, gb4,
     cw1, cb1, cw2, cb2, cw3, cb3, comb) = raw
    bf16 = jnp.bfloat16

    # 256-lane slab: fused layer-1 weight (rows 0:160) + gw1 (rows 160:170, cols 0:32)
    w256 = jnp.zeros((176, 256), jnp.float32)
    w256 = w256.at[0:64, :].set(pw1)
    w256 = w256.at[64:128, :].set(cw1)
    w256 = w256.at[128:160, :].set(gw2)
    w256 = w256.at[160:170, 0:32].set(gw1)       # K-padded 10 -> 16 (rows 170:176 stay zero)
    w256 = w256.astype(bf16)

    # 128-lane slab: fused layer-2 weight (rows 0:768) + fused head (rows 768:896, cols 0:9)
    w128 = jnp.zeros((896, 128), jnp.float32)
    w128 = w128.at[0:256, :].set(pw2)
    w128 = w128.at[256:512, :].set(cw2)
    w128 = w128.at[512:768, :].set(gw3)
    w128 = w128.at[768:896, 0:3].set(pw3)
    w128 = w128.at[768:896, 3:6].set(cw3)
    w128 = w128.at[768:896, 6:9].set(gw4)
    w128 = w128.astype(bf16)

    # input-independent: softmax over combination weights, fold in the *255 scale (once, here)
    nw = jax.nn.softmax(comb) * 255.0            # (parent, polygon, child)

    # bias / scalar slab (f32 — added to f32 accumulators)
    biases = jnp.zeros((8, 256), jnp.float32)
    biases = biases.at[0, 0:256].set(pb1)
    biases = biases.at[1, 0:256].set(cb1)
    biases = biases.at[2, 0:256].set(gb2)
    biases = biases.at[3, 0:128].set(pb2)
    biases = biases.at[4, 0:128].set(cb2)
    biases = biases.at[5, 0:128].set(gb3)
    biases = biases.at[6, 0:3].set(pb3)
    biases = biases.at[6, 3:6].set(cb3)
    biases = biases.at[6, 6:9].set(gb4)
    biases = biases.at[7, 0:32].set(gb1)
    biases = biases.at[7, 32:35].set(nw)

    return (w256, w128, biases)


# ----------------------------------------------------------------------------- wrapper
@jax.jit
def rgb_prediction_forward(parent_embed, child_polygon, child_embed, packed_params):
    w256, w128, biases = packed_params
    B = parent_embed.shape[0]

    # Prefer pre-padded [B,16] polygon features (data-prep time); pad here only as a fallback.
    poly = child_polygon
    if poly.shape[1] != 16:
        poly = jnp.pad(poly, ((0, 0), (0, 16 - poly.shape[1])))

    vmem = pl.BlockSpec(memory_space=pltpu.MemorySpace.VMEM)

    cost = pl.CostEstimate(
        flops=2 * (B * 16 * 32 + 3 * B * 160 * 256 + 3 * B * 768 * 128 + 3 * B * 128 * 16),
        transcendentals=3 * B * 16,
        bytes_accessed=(w256.size + w128.size) * 2 + biases.size * 4
                       + (2 * B * 64 + B * 16 + B * 3) * 4,
    )

    return pl.pallas_call(
        rgb_prediction_kernel,
        out_shape=jax.ShapeDtypeStruct((B, 3), jnp.float32),
        in_specs=[vmem, vmem, vmem,   # activations
                  vmem, vmem, vmem],  # packed weights / biases
        out_specs=vmem,
        cost_estimate=cost,
    )(parent_embed, child_embed, poly, w256, w128, biases)


# ----------------------------------------------------------------------------- references
def _reference(parent_embed, child_polygon, child_embed, raw, cast_bf16):
    (pw1, pb1, pw2, pb2, pw3, pb3,
     gw1, gb1, gw2, gb2, gw3, gb3, gw4, gb4,
     cw1, cb1, cw2, cb2, cw3, cb3, comb) = raw

    def lin(x, w, b):
        if cast_bf16:
            x = x.astype(jnp.bfloat16)
            w = w.astype(jnp.bfloat16)
        return jnp.dot(x, w, preferred_element_type=jnp.float32) + b

    relu = lambda v: jnp.maximum(v, 0.0)
    sig = lambda v: 1.0 / (1.0 + jnp.exp(-v))

    p = relu(lin(parent_embed, pw1, pb1))
    p = relu(lin(p, pw2, pb2))
    parent_rgb = sig(lin(p, pw3, pb3))

    g = relu(lin(child_polygon, gw1, gb1))
    g = relu(lin(g, gw2, gb2))
    g = relu(lin(g, gw3, gb3))
    polygon_rgb = sig(lin(g, gw4, gb4))

    c = relu(lin(child_embed, cw1, cb1))
    c = relu(lin(c, cw2, cb2))
    child_rgb = sig(lin(c, cw3, cb3))

    nw = jax.nn.softmax(comb)
    return (parent_rgb * nw[0] + polygon_rgb * nw[1] + child_rgb * nw[2]) * 255.0


# ----------------------------------------------------------------------------- main
if __name__ == "__main__":
    B = 8
    TEXT_EMBED_DIM = 64
    POLY_FEATURE_DIM = 10

    key = jax.random.PRNGKey(0)
    k_params, k_parent, k_poly, k_child = jax.random.split(key, 4)

    raw_params = make_raw_params(k_params, TEXT_EMBED_DIM, POLY_FEATURE_DIM)
    packed_params = pack_params(raw_params)

    parent_embed = jax.random.normal(k_parent, (B, TEXT_EMBED_DIM), jnp.float32)
    child_polygon = jax.random.normal(k_poly, (B, POLY_FEATURE_DIM), jnp.float32)
    child_embed = jax.random.normal(k_child, (B, TEXT_EMBED_DIM), jnp.float32)

    # data-prep-time zero-pad 10 -> 16 (matches the zero rows of the packed gw1)
    child_polygon_padded = jnp.pad(child_polygon, ((0, 0), (0, 16 - POLY_FEATURE_DIM)))

    out = rgb_prediction_forward(parent_embed, child_polygon_padded, child_embed, packed_params)
    out = jax.block_until_ready(out)
    assert out.shape == (B, 3)

    # Exact-math reference with the same bf16 matmul operands (tight tolerance).
    ref_bf16 = _reference(parent_embed, child_polygon, child_embed, raw_params, cast_bf16=True)
    assert jnp.allclose(out, ref_bf16, rtol=1e-3, atol=5e-2), "mismatch vs bf16-matched reference"

    # Full-f32 reference (module semantics), loose tolerance for bf16 weight rounding.
    ref_f32 = _reference(parent_embed, child_polygon, child_embed, raw_params, cast_bf16=False)
    assert jnp.allclose(out, ref_f32, rtol=5e-2, atol=5.0), "mismatch vs f32 reference"

    print("KERNEL_OK")
</pallas_src>

<mosaic_0001>
module attributes {stable_mosaic.version = 11 : i64} {
  func.func @rgb_prediction_kernel(%arg0: memref<8x64xf32, #tpu.memory_space<vmem>>, %arg1: memref<8x64xf32, #tpu.memory_space<vmem>>, %arg2: memref<8x16xf32, #tpu.memory_space<vmem>>, %arg3: memref<176x256xbf16, #tpu.memory_space<vmem>>, %arg4: memref<896x128xbf16, #tpu.memory_space<vmem>>, %arg5: memref<8x256xf32, #tpu.memory_space<vmem>>, %arg6: memref<8x3xf32, #tpu.memory_space<vmem>>) attributes {dimension_semantics = [], scalar_prefetch = 0 : i64, scratch_operands = 0 : i64, tpu.core_type = #tpu.core_type<tc>} {
    %c0 = arith.constant 0 : index
    %c0_0 = arith.constant 0 : index
    %0 = vector.load %arg3[%c0, %c0_0] : memref<176x256xbf16, #tpu.memory_space<vmem>>, vector<160x256xbf16>
    %c160 = arith.constant 160 : index
    %c0_1 = arith.constant 0 : index
    %1 = vector.load %arg3[%c160, %c0_1] : memref<176x256xbf16, #tpu.memory_space<vmem>>, vector<16x32xbf16>
    %c0_2 = arith.constant 0 : index
    %c0_3 = arith.constant 0 : index
    %2 = vector.load %arg4[%c0_2, %c0_3] : memref<896x128xbf16, #tpu.memory_space<vmem>>, vector<768x128xbf16>
    %c768 = arith.constant 768 : index
    %c0_4 = arith.constant 0 : index
    %3 = vector.load %arg4[%c768, %c0_4] : memref<896x128xbf16, #tpu.memory_space<vmem>>, vector<128x16xbf16>
    %c0_5 = arith.constant 0 : index
    %c0_6 = arith.constant 0 : index
    %4 = vector.load %arg5[%c0_5, %c0_6] : memref<8x256xf32, #tpu.memory_space<vmem>>, vector<1x256xf32>
    %c1 = arith.constant 1 : index
    %c0_7 = arith.constant 0 : index
    %5 = vector.load %arg5[%c1, %c0_7] : memref<8x256xf32, #tpu.memory_space<vmem>>, vector<1x256xf32>
    %c2 = arith.constant 2 : index
    %c0_8 = arith.constant 0 : index
    %6 = vector.load %arg5[%c2, %c0_8] : memref<8x256xf32, #tpu.memory_space<vmem>>, vector<1x256xf32>
    %c3 = arith.constant 3 : index
    %c0_9 = arith.constant 0 : index
    %7 = vector.load %arg5[%c3, %c0_9] : memref<8x256xf32, #tpu.memory_space<vmem>>, vector<1x128xf32>
    %c4 = arith.constant 4 : index
    %c0_10 = arith.constant 0 : index
    %8 = vector.load %arg5[%c4, %c0_10] : memref<8x256xf32, #tpu.memory_space<vmem>>, vector<1x128xf32>
    %c5 = arith.constant 5 : index
    %c0_11 = arith.constant 0 : index
    %9 = vector.load %arg5[%c5, %c0_11] : memref<8x256xf32, #tpu.memory_space<vmem>>, vector<1x128xf32>
    %c6 = arith.constant 6 : index
    %c0_12 = arith.constant 0 : index
    %10 = vector.load %arg5[%c6, %c0_12] : memref<8x256xf32, #tpu.memory_space<vmem>>, vector<1x16xf32>
    %c7 = arith.constant 7 : index
    %c0_13 = arith.constant 0 : index
    %11 = vector.load %arg5[%c7, %c0_13] : memref<8x256xf32, #tpu.memory_space<vmem>>, vector<1x32xf32>
    %c7_14 = arith.constant 7 : index
    %c32 = arith.constant 32 : index
    %12 = vector.load %arg5[%c7_14, %c32] : memref<8x256xf32, #tpu.memory_space<vmem>>, vector<1x1xf32>
    %c7_15 = arith.constant 7 : index
    %c33 = arith.constant 33 : index
    %13 = vector.load %arg5[%c7_15, %c33] : memref<8x256xf32, #tpu.memory_space<vmem>>, vector<1x1xf32>
    %c7_16 = arith.constant 7 : index
    %c34 = arith.constant 34 : index
    %14 = vector.load %arg5[%c7_16, %c34] : memref<8x256xf32, #tpu.memory_space<vmem>>, vector<1x1xf32>
    %c0_17 = arith.constant 0 : index
    %c0_18 = arith.constant 0 : index
    %15 = vector.load %arg2[%c0_17, %c0_18] : memref<8x16xf32, #tpu.memory_space<vmem>>, vector<8x16xf32>
    %16 = arith.truncf %15 : vector<8x16xf32> to vector<8x16xbf16>
    %cst = arith.constant dense<0.000000e+00> : vector<8x32xf32>
    %17 = tpu.matmul %16, %1, %cst {dimension_numbers = #tpu.dot_dimension_numbers<[1], [0], [0], [1], [0, 0, 1, 1], [], []>} : vector<8x16xbf16>, vector<16x32xbf16>, vector<8x32xf32> -> vector<8x32xf32>
    %18 = vector.broadcast %11 : vector<1x32xf32> to vector<8x32xf32>
    %19 = arith.addf %17, %18 : vector<8x32xf32>
    %cst_19 = arith.constant 0.000000e+00 : f32
    %20 = vector.broadcast %cst_19 : f32 to vector<8x32xf32>
    %21 = arith.maximumf %19, %20 : vector<8x32xf32>
    %cst_20 = arith.constant 0.000000e+00 : f32
    %22 = vector.broadcast %cst_20 : f32 to vector<8x64xf32>
    %cst_21 = arith.constant 0.000000e+00 : f32
    %23 = vector.broadcast %cst_21 : f32 to vector<8x32xf32>
    %c0_22 = arith.constant 0 : index
    %c0_23 = arith.constant 0 : index
    %24 = vector.load %arg0[%c0_22, %c0_23] : memref<8x64xf32, #tpu.memory_space<vmem>>, vector<8x64xf32>
    %25 = tpu.concatenate %24, %22, %23 in 1 : vector<8x64xf32>, vector<8x64xf32>, vector<8x32xf32> -> vector<8x160xf32>
    %c0_24 = arith.constant 0 : index
    %c0_25 = arith.constant 0 : index
    %26 = vector.load %arg1[%c0_24, %c0_25] : memref<8x64xf32, #tpu.memory_space<vmem>>, vector<8x64xf32>
    %27 = tpu.concatenate %22, %26, %23 in 1 : vector<8x64xf32>, vector<8x64xf32>, vector<8x32xf32> -> vector<8x160xf32>
    %28 = tpu.concatenate %22, %22, %21 in 1 : vector<8x64xf32>, vector<8x64xf32>, vector<8x32xf32> -> vector<8x160xf32>
    %29 = tpu.concatenate %25, %27, %28 in 0 : vector<8x160xf32>, vector<8x160xf32>, vector<8x160xf32> -> vector<24x160xf32>
    %30 = vector.shape_cast %4 : vector<1x256xf32> to vector<1x256xf32>
    %31 = vector.broadcast %30 : vector<1x256xf32> to vector<8x256xf32>
    %32 = vector.shape_cast %5 : vector<1x256xf32> to vector<1x256xf32>
    %33 = vector.broadcast %32 : vector<1x256xf32> to vector<8x256xf32>
    %34 = vector.shape_cast %6 : vector<1x256xf32> to vector<1x256xf32>
    %35 = vector.broadcast %34 : vector<1x256xf32> to vector<8x256xf32>
    %36 = tpu.concatenate %31, %33, %35 in 0 : vector<8x256xf32>, vector<8x256xf32>, vector<8x256xf32> -> vector<24x256xf32>
    %37 = arith.truncf %29 : vector<24x160xf32> to vector<24x160xbf16>
    %cst_26 = arith.constant dense<0.000000e+00> : vector<24x256xf32>
    %38 = tpu.matmul %37, %0, %cst_26 {dimension_numbers = #tpu.dot_dimension_numbers<[1], [0], [0], [1], [0, 0, 1, 1], [], []>} : vector<24x160xbf16>, vector<160x256xbf16>, vector<24x256xf32> -> vector<24x256xf32>
    %39 = arith.addf %38, %36 : vector<24x256xf32>
    %cst_27 = arith.constant 0.000000e+00 : f32
    %40 = vector.broadcast %cst_27 : f32 to vector<24x256xf32>
    %41 = arith.maximumf %39, %40 : vector<24x256xf32>
    %cst_28 = arith.constant 0.000000e+00 : f32
    %42 = vector.broadcast %cst_28 : f32 to vector<8x256xf32>
    %43 = vector.extract_strided_slice %41 {offsets = [0, 0], sizes = [8, 256], strides = [1, 1]} : vector<24x256xf32> to vector<8x256xf32>
    %44 = tpu.concatenate %43, %42, %42 in 1 : vector<8x256xf32>, vector<8x256xf32>, vector<8x256xf32> -> vector<8x768xf32>
    %45 = vector.extract_strided_slice %41 {offsets = [8, 0], sizes = [8, 256], strides = [1, 1]} : vector<24x256xf32> to vector<8x256xf32>
    %46 = tpu.concatenate %42, %45, %42 in 1 : vector<8x256xf32>, vector<8x256xf32>, vector<8x256xf32> -> vector<8x768xf32>
    %47 = vector.extract_strided_slice %41 {offsets = [16, 0], sizes = [8, 256], strides = [1, 1]} : vector<24x256xf32> to vector<8x256xf32>
    %48 = tpu.concatenate %42, %42, %47 in 1 : vector<8x256xf32>, vector<8x256xf32>, vector<8x256xf32> -> vector<8x768xf32>
    %49 = tpu.concatenate %44, %46, %48 in 0 : vector<8x768xf32>, vector<8x768xf32>, vector<8x768xf32> -> vector<24x768xf32>
    %50 = vector.shape_cast %7 : vector<1x128xf32> to vector<1x128xf32>
    %51 = vector.broadcast %50 : vector<1x128xf32> to vector<8x128xf32>
    %52 = vector.shape_cast %8 : vector<1x128xf32> to vector<1x128xf32>
    %53 = vector.broadcast %52 : vector<1x128xf32> to vector<8x128xf32>
    %54 = vector.shape_cast %9 : vector<1x128xf32> to vector<1x128xf32>
    %55 = vector.broadcast %54 : vector<1x128xf32> to vector<8x128xf32>
    %56 = tpu.concatenate %51, %53, %55 in 0 : vector<8x128xf32>, vector<8x128xf32>, vector<8x128xf32> -> vector<24x128xf32>
    %57 = arith.truncf %49 : vector<24x768xf32> to vector<24x768xbf16>
    %cst_29 = arith.constant dense<0.000000e+00> : vector<24x128xf32>
    %58 = tpu.matmul %57, %2, %cst_29 {dimension_numbers = #tpu.dot_dimension_numbers<[1], [0], [0], [1], [0, 0, 1, 1], [], []>} : vector<24x768xbf16>, vector<768x128xbf16>, vector<24x128xf32> -> vector<24x128xf32>
    %59 = arith.addf %58, %56 : vector<24x128xf32>
    %cst_30 = arith.constant 0.000000e+00 : f32
    %60 = vector.broadcast %cst_30 : f32 to vector<24x128xf32>
    %61 = arith.maximumf %59, %60 : vector<24x128xf32>
    %62 = arith.truncf %61 : vector<24x128xf32> to vector<24x128xbf16>
    %cst_31 = arith.constant dense<0.000000e+00> : vector<24x16xf32>
    %63 = tpu.matmul %62, %3, %cst_31 {dimension_numbers = #tpu.dot_dimension_numbers<[1], [0], [0], [1], [0, 0, 1, 1], [], []>} : vector<24x128xbf16>, vector<128x16xbf16>, vector<24x16xf32> -> vector<24x16xf32>
    %64 = vector.broadcast %10 : vector<1x16xf32> to vector<24x16xf32>
    %65 = arith.addf %63, %64 : vector<24x16xf32>
    %cst_32 = arith.constant 5.000000e-01 : f32
    %66 = vector.broadcast %cst_32 : f32 to vector<24x16xf32>
    %67 = arith.mulf %66, %65 : vector<24x16xf32>
    %68 = math.tanh %67 : vector<24x16xf32>
    %cst_33 = arith.constant 5.000000e-01 : f32
    %69 = vector.broadcast %cst_33 : f32 to vector<24x16xf32>
    %70 = arith.mulf %69, %68 : vector<24x16xf32>
    %cst_34 = arith.constant 5.000000e-01 : f32
    %71 = vector.broadcast %cst_34 : f32 to vector<24x16xf32>
    %72 = arith.addf %70, %71 : vector<24x16xf32>
    %73 = vector.extract_strided_slice %72 {offsets = [0, 0], sizes = [8, 3], strides = [1, 1]} : vector<24x16xf32> to vector<8x3xf32>
    %74 = vector.broadcast %12 : vector<1x1xf32> to vector<8x3xf32>
    %75 = arith.mulf %73, %74 : vector<8x3xf32>
    %76 = vector.extract_strided_slice %72 {offsets = [16, 6], sizes = [8, 3], strides = [1, 1]} : vector<24x16xf32> to vector<8x3xf32>
    %77 = vector.broadcast %13 : vector<1x1xf32> to vector<8x3xf32>
    %78 = arith.mulf %76, %77 : vector<8x3xf32>
    %79 = arith.addf %75, %78 : vector<8x3xf32>
    %80 = vector.extract_strided_slice %72 {offsets = [8, 3], sizes = [8, 3], strides = [1, 1]} : vector<24x16xf32> to vector<8x3xf32>
    %81 = vector.broadcast %14 : vector<1x1xf32> to vector<8x3xf32>
    %82 = arith.mulf %80, %81 : vector<8x3xf32>
    %83 = arith.addf %79, %82 : vector<8x3xf32>
    %c0_35 = arith.constant 0 : index
    %c0_36 = arith.constant 0 : index
    %84 = vector.load %arg6[%c0_35, %c0_36] : memref<8x3xf32, #tpu.memory_space<vmem>>, vector<8x3xf32>
    tpu.vector_store %arg6[%c0_35, %c0_36], %83 {strides = array<i32>} : memref<8x3xf32, #tpu.memory_space<vmem>>, vector<8x3xf32>,
    return
  }
}

</mosaic_0001>

<llo_original>
// kernel: rgb_prediction_forward.1
$region0: #{rgb_prediction_forward.1}
  #allocation0 [shape = 'u32[]', space=smem, size = 0x4, offset = 0x4, fixed_abs, tag = 'smem constant byte address 0x4 - core index']
  #allocation1 [shape = 'u32[144,128]{1,0:T(1,128)}', space=vmem, size = 0x12000, scoped, tag = 'internal scratch']
  %s0 = inlined_call_operand.hbm [shape: f32[8,64], index: 0, kind: input, shape index: {}]
  %s1 = inlined_call_operand.hbm [shape: f32[8,64], index: 1, kind: input, shape index: {}]
  %s2 = inlined_call_operand.hbm [shape: f32[8,16], index: 2, kind: input, shape index: {}]
  %s3 = inlined_call_operand.hbm [shape: bf16[176,256], index: 3, kind: input, shape index: {}]
  %s4 = inlined_call_operand.hbm [shape: bf16[896,128], index: 4, kind: input, shape index: {}]
  %s5 = inlined_call_operand.vmem [shape: f32[8,256], index: 5, kind: input, shape index: {}]
  %s6 = inlined_call_operand.vmem [shape: f32[8,3], index: 6, kind: output, shape index: {}]
  %s7 = sld [smem:[#allocation0]]
  $region54: #{rgb_prediction_forward.1} parent=0
    _
  %s9 = ssub.s32 1, %s7
  %s10 = scalar_select 0, %s9, %s7
  $region1: #{rgb_prediction_forward.1} parent=0
    #allocation2 [shape = 'u8[4096]{0}', space=vmem, size = 0x1000, scoped, tag = 'input window, operand 0, single buffered']
    #allocation3 [shape = 's32[1]{0}', space=sflag, size = 0x4, scoped, tag = 'scoped memory for rgb_prediction_forward.1']
    #allocation4 [shape = 'u8[4096]{0}', space=vmem, size = 0x1000, scoped, tag = 'input window, operand 1, single buffered']
    #allocation5 [shape = 's32[1]{0}', space=sflag, size = 0x4, scoped, tag = 'scoped memory for rgb_prediction_forward.1']
    #allocation6 [shape = 'u8[4096]{0}', space=vmem, size = 0x1000, scoped, tag = 'input window, operand 2, single buffered']
    #allocation7 [shape = 'u8[90112]{0}', space=vmem, size = 0x16000, scoped, tag = 'input window, operand 3, single buffered']
    #allocation8 [shape = 's32[1]{0}', space=sflag, size = 0x4, scoped, tag = 'scoped memory for rgb_prediction_forward.1']
    #allocation9 [shape = 'u8[229376]{0}', space=vmem, size = 0x38000, scoped, tag = 'input window, operand 4, single buffered']
    %11 = vsyncpa [#allocation3], 0
    %12 = vsyncpa [#allocation5], 0
    %13 = vsyncpa [#allocation8], 0
    // Predicated region
    $region2: #{rgb_prediction_forward.1} parent=1 // pred_check
      _
    $region3: #{rgb_prediction_forward.1} parent=1 // pred_check_branch
      %15 = sbr.rel (0) target = $region5
    $region4: #{rgb_prediction_forward.1} parent=1 // pred_region
      %s17 = ssub.s32 128, 128
      %18 = vsyncadd [#allocation3], %s17
      %s20 = sshll.u32 [#allocation2], 4
      %s21 = int_to_ptr.vmem [resolvable:$true] %s20
      %23 = dma.hbm_to_vmem [thread:$0]  %s0, 128, %s21, [#allocation3]
    $region5: #{rgb_prediction_forward.1} parent=1 // pred_fallthru
      _
    // Predicated region
    $region6: #{rgb_prediction_forward.1} parent=1 // pred_check
      _
    $region7: #{rgb_prediction_forward.1} parent=1 // pred_check_branch
      %25 = sbr.rel (0) target = $region9
    $region8: #{rgb_prediction_forward.1} parent=1 // pred_region
      %s27 = ssub.s32 128, 128
      %28 = vsyncadd [#allocation5], %s27
      %s30 = sshll.u32 [#allocation4], 4
      %s31 = int_to_ptr.vmem [resolvable:$true] %s30
      %33 = dma.hbm_to_vmem [thread:$0]  %s1, 128, %s31, [#allocation5]
    $region9: #{rgb_prediction_forward.1} parent=1 // pred_fallthru
      _
    // Predicated region
    $region10: #{rgb_prediction_forward.1} parent=1 // pred_check
      _
    $region11: #{rgb_prediction_forward.1} parent=1 // pred_check_branch
      %35 = sbr.rel (0) target = $region13
    $region12: #{rgb_prediction_forward.1} parent=1 // pred_region
      %s37 = ssub.s32 128, 128
      %38 = vsyncadd [#allocation5], %s37
      %s40 = sshll.u32 [#allocation6], 4
      %s41 = int_to_ptr.vmem [resolvable:$true] %s40
      %43 = dma.hbm_to_vmem [thread:$0]  %s2, 128, %s41, [#allocation5]
    $region13: #{rgb_prediction_forward.1} parent=1 // pred_fallthru
      _
    // Predicated region
    $region14: #{rgb_prediction_forward.1} parent=1 // pred_check
      _
    $region15: #{rgb_prediction_forward.1} parent=1 // pred_check_branch
      %45 = sbr.rel (0) target = $region17
    $region16: #{rgb_prediction_forward.1} parent=1 // pred_region
      %s47 = ssub.s32 2816, 2816
      %48 = vsyncadd [#allocation8], %s47
      %s49 = sshll.u32 [#allocation7], 4
      %s50 = int_to_ptr.vmem [resolvable:$true] %s49
      %55 = dma.hbm_to_vmem [thread:$0]  %s3, 2816, %s50, [#allocation8], 128, 128, 8
    $region17: #{rgb_prediction_forward.1} parent=1 // pred_fallthru
      _
    // Predicated region
    $region18: #{rgb_prediction_forward.1} parent=1 // pred_check
      _
    $region19: #{rgb_prediction_forward.1} parent=1 // pred_check_branch
      %57 = sbr.rel (0) target = $region21
    $region20: #{rgb_prediction_forward.1} parent=1 // pred_region
      %s59 = ssub.s32 7168, 7168
      %60 = vsyncadd [#allocation8], %s59
      %s61 = sshll.u32 [#allocation9], 4
      %s62 = int_to_ptr.vmem [resolvable:$true] %s61
      %67 = dma.hbm_to_vmem [thread:$0]  %s4, 7168, %s62, [#allocation8], 64, 64, 4
    $region21: #{rgb_prediction_forward.1} parent=1 // pred_fallthru
      _
    // Predicated region
    $region22: #{rgb_prediction_forward.1} parent=1 // pred_check
      _
    $region23: #{rgb_prediction_forward.1} parent=1 // pred_check_branch
      %69 = sbr.rel (0) target = $region25
    $region24: #{rgb_prediction_forward.1} parent=1 // pred_region
      _
    $region25: #{rgb_prediction_forward.1} parent=1 // pred_fallthru
      _
    // Predicated region
    $region26: #{rgb_prediction_forward.1} parent=1 // pred_check
      _
    $region27: #{rgb_prediction_forward.1} parent=1 // pred_check_branch
      %71 = sbr.rel (0) target = $region29
    $region28: #{rgb_prediction_forward.1} parent=1 // pred_region
      %72 = dma.done [#allocation3], 128
    $region29: #{rgb_prediction_forward.1} parent=1 // pred_fallthru
      _
    // Predicated region
    $region30: #{rgb_prediction_forward.1} parent=1 // pred_check
      _
    $region31: #{rgb_prediction_forward.1} parent=1 // pred_check_branch
      %74 = sbr.rel (0) target = $region33
    $region32: #{rgb_prediction_forward.1} parent=1 // pred_region
      %75 = dma.done [#allocation5], 128
    $region33: #{rgb_prediction_forward.1} parent=1 // pred_fallthru
      _
    // Predicated region
    $region34: #{rgb_prediction_forward.1} parent=1 // pred_check
      _
    $region35: #{rgb_prediction_forward.1} parent=1 // pred_check_branch
      %77 = sbr.rel (0) target = $region37
    $region36: #{rgb_prediction_forward.1} parent=1 // pred_region
      %78 = dma.done [#allocation5], 128
    $region37: #{rgb_prediction_forward.1} parent=1 // pred_fallthru
      _
    // Predicated region
    $region38: #{rgb_prediction_forward.1} parent=1 // pred_check
      _
    $region39: #{rgb_prediction_forward.1} parent=1 // pred_check_branch
      %80 = sbr.rel (0) target = $region41
    $region40: #{rgb_prediction_forward.1} parent=1 // pred_region
      %81 = dma.done [#allocation8], 2816
    $region41: #{rgb_prediction_forward.1} parent=1 // pred_fallthru
      _
    // Predicated region
    $region42: #{rgb_prediction_forward.1} parent=1 // pred_check
      _
    $region43: #{rgb_prediction_forward.1} parent=1 // pred_check_branch
      %83 = sbr.rel (0) target = $region45
    $region44: #{rgb_prediction_forward.1} parent=1 // pred_region
      %84 = dma.done [#allocation8], 7168
    $region45: #{rgb_prediction_forward.1} parent=1 // pred_fallthru
      _
    %v86 = vld [vmem:[#allocation7] sm:$0xff]
    %v87 = vld [vmem:[#allocation7 + $0x8] sm:$0xff]
    %v88 = vld [vmem:[#allocation7 + $0x10] sm:$0xff]
    %v89 = vld [vmem:[#allocation7 + $0x18] sm:$0xff]
    %v90 = vld [vmem:[#allocation7 + $0x20] sm:$0xff]
    %v91 = vld [vmem:[#allocation7 + $0x28] sm:$0xff]
    %v92 = vld [vmem:[#allocation7 + $0x30] sm:$0xff]
    %v93 = vld [vmem:[#allocation7 + $0x38] sm:$0xff]
    %v94 = vld [vmem:[#allocation7 + $0x40] sm:$0xff]
    %v95 = vld [vmem:[#allocation7 + $0x48] sm:$0xff]
    %v96 = vld [vmem:[#allocation7 + $0x50] sm:$0xff]
    %v97 = vld [vmem:[#allocation7 + $0x58] sm:$0xff]
    %v98 = vld [vmem:[#allocation7 + $0x60] sm:$0xff]
    %v99 = vld [vmem:[#allocation7 + $0x68] sm:$0xff]
    %v100 = vld [vmem:[#allocation7 + $0x70] sm:$0xff]
    %v101 = vld [vmem:[#allocation7 + $0x78] sm:$0xff]
    %v102 = vld [vmem:[#allocation7 + $0x80] sm:$0xff]
    %v103 = vld [vmem:[#allocation7 + $0x88] sm:$0xff]
    %v104 = vld [vmem:[#allocation7 + $0x90] sm:$0xff]
    %v105 = vld [vmem:[#allocation7 + $0x98] sm:$0xff]
    %v106 = vld [vmem:[#allocation7 + $0xa0] sm:$0xf]
    %v107 = vld [vmem:[#allocation7 + $0xa8] sm:$0xf]
    %v108 = vld [vmem:[#allocation9] sm:$0xf]
    %v109 = vld [vmem:[#allocation9 + $0x4] sm:$0xf]
    %v110 = vld [vmem:[#allocation9 + $0x8] sm:$0xf]
    %v111 = vld [vmem:[#allocation9 + $0xc] sm:$0xf]
    %v112 = vld [vmem:[#allocation9 + $0x10] sm:$0xf]
    %v113 = vld [vmem:[#allocation9 + $0x14] sm:$0xf]
    %v114 = vld [vmem:[#allocation9 + $0x18] sm:$0xf]
    %v115 = vld [vmem:[#allocation9 + $0x1c] sm:$0xf]
    %v116 = vld [vmem:[#allocation9 + $0x20] sm:$0xf]
    %v117 = vld [vmem:[#allocation9 + $0x24] sm:$0xf]
    %v118 = vld [vmem:[#allocation9 + $0x28] sm:$0xf]
    %v119 = vld [vmem:[#allocation9 + $0x2c] sm:$0xf]
    %v120 = vld [vmem:[#allocation9 + $0x30] sm:$0xf]
    %v121 = vld [vmem:[#allocation9 + $0x34] sm:$0xf]
    %v122 = vld [vmem:[#allocation9 + $0x38] sm:$0xf]
    %v123 = vld [vmem:[#allocation9 + $0x3c] sm:$0xf]
    %v124 = vld [vmem:[#allocation9 + $0x40] sm:$0xf]
    %v125 = vld [vmem:[#allocation9 + $0x44] sm:$0xf]
    %v126 = vld [vmem:[#allocation9 + $0x48] sm:$0xf]
    %v127 = vld [vmem:[#allocation9 + $0x4c] sm:$0xf]
    %v128 = vld [vmem:[#allocation9 + $0x50] sm:$0xf]
    %v129 = vld [vmem:[#allocation9 + $0x54] sm:$0xf]
    %v130 = vld [vmem:[#allocation9 + $0x58] sm:$0xf]
    %v131 = vld [vmem:[#allocation9 + $0x5c] sm:$0xf]
    %v132 = vld [vmem:[#allocation9 + $0x60] sm:$0xf]
    %v133 = vld [vmem:[#allocation9 + $0x64] sm:$0xf]
    %v134 = vld [vmem:[#allocation9 + $0x68] sm:$0xf]
    %v135 = vld [vmem:[#allocation9 + $0x6c] sm:$0xf]
    %v136 = vld [vmem:[#allocation9 + $0x70] sm:$0xf]
    %v137 = vld [vmem:[#allocation9 + $0x74] sm:$0xf]
    %v138 = vld [vmem:[#allocation9 + $0x78] sm:$0xf]
    %v139 = vld [vmem:[#allocation9 + $0x7c] sm:$0xf]
    %v140 = vld [vmem:[#allocation9 + $0x80] sm:$0xf]
    %v141 = vld [vmem:[#allocation9 + $0x84] sm:$0xf]
    %v142 = vld [vmem:[#allocation9 + $0x88] sm:$0xf]
    %v143 = vld [vmem:[#allocation9 + $0x8c] sm:$0xf]
    %v144 = vld [vmem:[#allocation9 + $0x90] sm:$0xf]
    %v145 = vld [vmem:[#allocation9 + $0x94] sm:$0xf]
    %v146 = vld [vmem:[#allocation9 + $0x98] sm:$0xf]
    %v147 = vld [vmem:[#allocation9 + $0x9c] sm:$0xf]
    %v148 = vld [vmem:[#allocation9 + $0xa0] sm:$0xf]
    %v149 = vld [vmem:[#allocation9 + $0xa4] sm:$0xf]
    %v150 = vld [vmem:[#allocation9 + $0xa8] sm:$0xf]
    %v151 = vld [vmem:[#allocation9 + $0xac] sm:$0xf]
    %v152 = vld [vmem:[#allocation9 + $0xb0] sm:$0xf]
    %v153 = vld [vmem:[#allocation9 + $0xb4] sm:$0xf]
    %v154 = vld [vmem:[#allocation9 + $0xb8] sm:$0xf]
    %v155 = vld [vmem:[#allocation9 + $0xbc] sm:$0xf]
    %v156 = vld [vmem:[#allocation9 + $0xc0] sm:$0xf]
    %v157 = vld [vmem:[#allocation9 + $0xc4] sm:$0xf]
    %v158 = vld [vmem:[#allocation9 + $0xc8] sm:$0xf]
    %v159 = vld [vmem:[#allocation9 + $0xcc] sm:$0xf]
    %v160 = vld [vmem:[#allocation9 + $0xd0] sm:$0xf]
    %v161 = vld [vmem:[#allocation9 + $0xd4] sm:$0xf]
    %v162 = vld [vmem:[#allocation9 + $0xd8] sm:$0xf]
    %v163 = vld [vmem:[#allocation9 + $0xdc] sm:$0xf]
    %v164 = vld [vmem:[#allocation9 + $0xe0] sm:$0xf]
    %v165 = vld [vmem:[#allocation9 + $0xe4] sm:$0xf]
    %v166 = vld [vmem:[#allocation9 + $0xe8] sm:$0xf]
    %v167 = vld [vmem:[#allocation9 + $0xec] sm:$0xf]
    %v168 = vld [vmem:[#allocation9 + $0xf0] sm:$0xf]
    %v169 = vld [vmem:[#allocation9 + $0xf4] sm:$0xf]
    %v170 = vld [vmem:[#allocation9 + $0xf8] sm:$0xf]
    %v171 = vld [vmem:[#allocation9 + $0xfc] sm:$0xf]
    %v172 = vld [vmem:[#allocation9 + $0x100] sm:$0xf]
    %v173 = vld [vmem:[#allocation9 + $0x104] sm:$0xf]
    %v174 = vld [vmem:[#allocation9 + $0x108] sm:$0xf]
    %v175 = vld [vmem:[#allocation9 + $0x10c] sm:$0xf]
    %v176 = vld [vmem:[#allocation9 + $0x110] sm:$0xf]
    %v177 = vld [vmem:[#allocation9 + $0x114] sm:$0xf]
    %v178 = vld [vmem:[#allocation9 + $0x118] sm:$0xf]
    %v179 = vld [vmem:[#allocation9 + $0x11c] sm:$0xf]
    %v180 = vld [vmem:[#allocation9 + $0x120] sm:$0xf]
    %v181 = vld [vmem:[#allocation9 + $0x124] sm:$0xf]
    %v182 = vld [vmem:[#allocation9 + $0x128] sm:$0xf]
    %v183 = vld [vmem:[#allocation9 + $0x12c] sm:$0xf]
    %v184 = vld [vmem:[#allocation9 + $0x130] sm:$0xf]
    %v185 = vld [vmem:[#allocation9 + $0x134] sm:$0xf]
    %v186 = vld [vmem:[#allocation9 + $0x138] sm:$0xf]
    %v187 = vld [vmem:[#allocation9 + $0x13c] sm:$0xf]
    %v188 = vld [vmem:[#allocation9 + $0x140] sm:$0xf]
    %v189 = vld [vmem:[#allocation9 + $0x144] sm:$0xf]
    %v190 = vld [vmem:[#allocation9 + $0x148] sm:$0xf]
    %v191 = vld [vmem:[#allocation9 + $0x14c] sm:$0xf]
    %v192 = vld [vmem:[#allocation9 + $0x150] sm:$0xf]
    %v193 = vld [vmem:[#allocation9 + $0x154] sm:$0xf]
    %v194 = vld [vmem:[#allocation9 + $0x158] sm:$0xf]
    %v195 = vld [vmem:[#allocation9 + $0x15c] sm:$0xf]
    %v196 = vld [vmem:[#allocation9 + $0x160] sm:$0xf]
    %v197 = vld [vmem:[#allocation9 + $0x164] sm:$0xf]
    %v198 = vld [vmem:[#allocation9 + $0x168] sm:$0xf]
    %v199 = vld [vmem:[#allocation9 + $0x16c] sm:$0xf]
    %v200 = vld [vmem:[#allocation9 + $0x170] sm:$0xf]
    %v201 = vld [vmem:[#allocation9 + $0x174] sm:$0xf]
    %v202 = vld [vmem:[#allocation9 + $0x178] sm:$0xf]
    %v203 = vld [vmem:[#allocation9 + $0x17c] sm:$0xf]
    %v204 = vld [vmem:[#allocation9 + $0x180] sm:$0xf]
    %v205 = vld [vmem:[#allocation9 + $0x184] sm:$0xf]
    %v206 = vld [vmem:[#allocation9 + $0x188] sm:$0xf]
    %v207 = vld [vmem:[#allocation9 + $0x18c] sm:$0xf]
    %v208 = vld [vmem:[#allocation9 + $0x190] sm:$0xf]
    %v209 = vld [vmem:[#allocation9 + $0x194] sm:$0xf]
    %v210 = vld [vmem:[#allocation9 + $0x198] sm:$0xf]
    %v211 = vld [vmem:[#allocation9 + $0x19c] sm:$0xf]
    %v212 = vld [vmem:[#allocation9 + $0x1a0] sm:$0xf]
    %v213 = vld [vmem:[#allocation9 + $0x1a4] sm:$0xf]
    %v214 = vld [vmem:[#allocation9 + $0x1a8] sm:$0xf]
    %v215 = vld [vmem:[#allocation9 + $0x1ac] sm:$0xf]
    %v216 = vld [vmem:[#allocation9 + $0x1b0] sm:$0xf]
    %v217 = vld [vmem:[#allocation9 + $0x1b4] sm:$0xf]
    %v218 = vld [vmem:[#allocation9 + $0x1b8] sm:$0xf]
    %v219 = vld [vmem:[#allocation9 + $0x1bc] sm:$0xf]
    %v220 = vld [vmem:[%s5] ss:$8 sm:$0x3]
    %s221 = scalar_lea.vmem %s5, 1
    %v222 = vld [vmem:[%s221] ss:$8 sm:$0x3]
    %s223 = scalar_lea.vmem %s5, 2
    %v224 = vld [vmem:[%s223] ss:$8 sm:$0x3]
    %v225 = vld [vmem:[%s5 + $0x3] ss:$0 sm:$0xff]
    %v226 = vld [vmem:[%s5 + $0x4] ss:$0 sm:$0xff]
    %v227 = vld [vmem:[%s5 + $0x5] ss:$0 sm:$0xff]
    %v228 = vld [vmem:[%s5 + $0x6] ss:$0 sm:$0xff]
    %v229 = vld [vmem:[%s5 + $0x7] ss:$0 sm:$0xff]
    %v230 = vld [vmem:[#allocation6] sm:$0xff]
    %v231 = vpack.c.bf16 %v230, %v230
    %v234 = vunpack.c.l.b16 %v106
    %v235 = vunpack.c.l.b16 %v107
    %v236 = vpack.c.b16 %v235, %v234
    %vm238 = vcmask 130048
    %v240 = vsel %vm238, %v231, 0
    %242 = vmatprep.subr.bf16.mxu0 0
    %243 = vmatpush1.bf16.msra.mxu0 %v236
    %244 = vmatprep.subr.bf16.mxu0 0
    %245 = vmatpush1.bf16.msra.mxu0 0
    %246 = vmatprep.subr.bf16.mxu0 0
    %247 = vmatpush1.bf16.msra.mxu0 0
    %248 = vmatprep.subr.bf16.mxu0 0
    %249 = vmatpush1.bf16.msra.mxu0 0
    %250 = vmatprep.subr.bf16.mxu0 0
    %251 = vmatpush1.bf16.msra.mxu0 0
    %252 = vmatprep.subr.bf16.mxu0 0
    %253 = vmatpush1.bf16.msra.mxu0 0
    %254 = vmatprep.subr.bf16.mxu0 0
    %255 = vmatpush1.bf16.msra.mxu0 0
    %256 = vmatprep.subr.bf16.mxu0 0
    %257 = vmatpush1.bf16.msra.mxu0 0
    %258 = vmatprep.subr.bf16.mxu0 0
    %259 = vmatpush1.bf16.msra.mxu0 0
    %260 = vmatprep.subr.bf16.mxu0 0
    %261 = vmatpush1.bf16.msra.mxu0 0
    %262 = vmatprep.subr.bf16.mxu0 0
    %263 = vmatpush1.bf16.msra.mxu0 0
    %264 = vmatprep.subr.bf16.mxu0 0
    %265 = vmatpush1.bf16.msra.mxu0 0
    %266 = vmatprep.subr.bf16.mxu0 0
    %267 = vmatpush1.bf16.msra.mxu0 0
    %268 = vmatprep.subr.bf16.mxu0 0
    %269 = vmatpush1.bf16.msra.mxu0 0
    %270 = vmatprep.subr.bf16.mxu0 0
    %271 = vmatpush1.bf16.msra.mxu0 0
    %272 = vmatprep.subr.bf16.mxu0 0
    %273 = vmatpush1.bf16.msra.mxu0 0
    %274 = vmatprep.mubr.bf16.mxu0 0
    %275 = vmatmul.mubr.bf16.gmra.mrb[0].mxu0 %v240
    %v276 = vpop.f32.mrb[0].mxu0
    %v277 = vadd.f32 %v229, %v276
    %v278 = vpop.f32.mrb[0].mxu0
    %v279 = vpop.f32.mrb[0].mxu0
    %v280 = vpop.f32.mrb[0].mxu0
    %281 = vdwg.mxu0
    %v282 = vmax.f32 %v277, 0.0
    %v283 = vld [vmem:[#allocation2] sm:$0xff]
    %vm284 = vcmask 523264
    %v285 = vsel %vm284, %v283, 0.0
    %v286 = vld [vmem:[#allocation4] sm:$0xff]
    %288 = vrot.lane.b32.xlu0 %v286, 64
    %v289 = vpop.permute.xlu0 %288
    %v291 = vsel %vm284, 0.0, %v289
    %v293 = vlaneseq
    %v294 = vshrl.u32 %v293, 7
    %v295 = vsub.s32 0, %v294
    %v296 = vrot.slane %v220, %v295
    %v297 = vlaneseq
    %v298 = vshrl.u32 %v297, 7
    %v299 = vsub.s32 1, %v298
    %v300 = vrot.slane %v220, %v299
    %v304 = vlaneseq
    %v305 = vshrl.u32 %v304, 7
    %v306 = vsub.s32 0, %v305
    %v307 = vrot.slane %v222, %v306
    %v308 = vlaneseq
    %v309 = vshrl.u32 %v308, 7
    %v310 = vsub.s32 1, %v309
    %v311 = vrot.slane %v222, %v310
    %v315 = vlaneseq
    %v316 = vshrl.u32 %v315, 7
    %v317 = vsub.s32 0, %v316
    %v318 = vrot.slane %v224, %v317
    %v319 = vlaneseq
    %v320 = vshrl.u32 %v319, 7
    %v321 = vsub.s32 1, %v320
    %v322 = vrot.slane %v224, %v321
    %v325 = vpack.c.bf16 %v291, %v285
    %v326 = vpack.c.bf16 0.0, 0.0
    %v327 = vpack.c.bf16 %v282, %v282
    %v348 = vunpack.c.l.b16 %v86
    %v349 = vunpack.c.h.b16 %v86
    %v350 = vunpack.c.l.b16 %v87
    %v351 = vunpack.c.h.b16 %v87
    %v352 = vunpack.c.l.b16 %v88
    %v353 = vunpack.c.h.b16 %v88
    %v354 = vunpack.c.l.b16 %v89
    %v355 = vunpack.c.h.b16 %v89
    %v356 = vunpack.c.l.b16 %v90
    %v357 = vunpack.c.h.b16 %v90
    %v358 = vunpack.c.l.b16 %v91
    %v359 = vunpack.c.h.b16 %v91
    %v360 = vunpack.c.l.b16 %v92
    %v361 = vunpack.c.h.b16 %v92
    %v362 = vunpack.c.l.b16 %v93
    %v363 = vunpack.c.h.b16 %v93
    %v364 = vunpack.c.l.b16 %v94
    %v365 = vunpack.c.h.b16 %v94
    %v366 = vunpack.c.l.b16 %v95
    %v367 = vunpack.c.h.b16 %v95
    %v368 = vunpack.c.l.b16 %v96
    %v369 = vunpack.c.h.b16 %v96
    %v370 = vunpack.c.l.b16 %v97
    %v371 = vunpack.c.h.b16 %v97
    %v372 = vunpack.c.l.b16 %v98
    %v373 = vunpack.c.h.b16 %v98
    %v374 = vunpack.c.l.b16 %v99
    %v375 = vunpack.c.h.b16 %v99
    %v376 = vunpack.c.l.b16 %v100
    %v377 = vunpack.c.h.b16 %v100
    %v378 = vunpack.c.l.b16 %v101
    %v379 = vunpack.c.h.b16 %v101
    %v380 = vunpack.c.l.b16 %v102
    %v381 = vunpack.c.h.b16 %v102
    %v382 = vunpack.c.l.b16 %v103
    %v383 = vunpack.c.h.b16 %v103
    %v384 = vunpack.c.l.b16 %v104
    %v385 = vunpack.c.h.b16 %v104
    %v386 = vunpack.c.l.b16 %v105
    %v387 = vunpack.c.h.b16 %v105
    %v388 = vpack.c.b16 %v350, %v348
    %v389 = vpack.c.b16 %v351, %v349
    %v390 = vpack.c.b16 %v354, %v352
    %v391 = vpack.c.b16 %v355, %v353
    %v392 = vpack.c.b16 %v358, %v356
    %v393 = vpack.c.b16 %v359, %v357
    %v394 = vpack.c.b16 %v362, %v360
    %v395 = vpack.c.b16 %v363, %v361
    %v396 = vpack.c.b16 %v366, %v364
    %v397 = vpack.c.b16 %v367, %v365
    %v398 = vpack.c.b16 %v370, %v368
    %v399 = vpack.c.b16 %v371, %v369
    %v400 = vpack.c.b16 %v374, %v372
    %v401 = vpack.c.b16 %v375, %v373
    %v402 = vpack.c.b16 %v378, %v376
    %v403 = vpack.c.b16 %v379, %v377
    %v404 = vpack.c.b16 %v382, %v380
    %v405 = vpack.c.b16 %v383, %v381
    %v406 = vpack.c.b16 %v386, %v384
    %v407 = vpack.c.b16 %v387, %v385
    %vm428 = vcmask 261120
    %v430 = vsel %vm428, %v326, 0
    %v433 = vsel %vm428, %v327, 0
    %435 = vmatprep.subr.bf16.mxu0 %v389
    %436 = vmatpush1.bf16.msra.mxu0 %v388
    %437 = vmatprep.subr.bf16.mxu0 %v391
    %438 = vmatpush1.bf16.msra.mxu0 %v390
    %439 = vmatprep.subr.bf16.mxu0 %v393
    %440 = vmatpush1.bf16.msra.mxu0 %v392
    %441 = vmatprep.subr.bf16.mxu0 %v395
    %442 = vmatpush1.bf16.msra.mxu0 %v394
    %443 = vmatprep.subr.bf16.mxu0 %v397
    %444 = vmatpush1.bf16.msra.mxu0 %v396
    %445 = vmatprep.subr.bf16.mxu0 %v399
    %446 = vmatpush1.bf16.msra.mxu0 %v398
    %447 = vmatprep.subr.bf16.mxu0 %v401
    %448 = vmatpush1.bf16.msra.mxu0 %v400
    %449 = vmatprep.subr.bf16.mxu0 %v403
    %450 = vmatpush1.bf16.msra.mxu0 %v402
    %451 = vmatprep.subr.bf16.mxu0 %v405
    %452 = vmatpush1.bf16.msra.mxu0 %v404
    %453 = vmatprep.subr.bf16.mxu0 %v407
    %454 = vmatpush1.bf16.msra.mxu0 %v406
    %455 = vmatprep.subr.bf16.mxu0 0
    %456 = vmatpush1.bf16.msra.mxu0 0
    %457 = vmatprep.subr.bf16.mxu0 0
    %458 = vmatpush1.bf16.msra.mxu0 0
    %459 = vmatprep.subr.bf16.mxu0 0
    %460 = vmatpush1.bf16.msra.mxu0 0
    %461 = vmatprep.subr.bf16.mxu0 0
    %462 = vmatpush1.bf16.msra.mxu0 0
    %463 = vmatprep.subr.bf16.mxu0 0
    %464 = vmatpush1.bf16.msra.mxu0 0
    %465 = vmatprep.subr.bf16.mxu0 0
    %466 = vmatpush1.bf16.msra.mxu0 0
    %467 = vmatprep.mubr.bf16.mxu0 %v430
    %468 = vmatmul.mubr.bf16.gmra.mrb[0].mxu0 %v325
    %v469 = vpop.f32.mrb[0].mxu0
    %v470 = vadd.f32 %v296, %v469
    %v471 = vpop.f32.mrb[0].mxu0
    %v472 = vadd.f32 %v300, %v471
    %v473 = vpop.f32.mrb[0].mxu0
    %v474 = vadd.f32 %v307, %v473
    %v475 = vpop.f32.mrb[0].mxu0
    %v476 = vadd.f32 %v311, %v475
    %477 = vmatprep.mubr.bf16.mxu0 %v433
    %478 = vmatmul.mubr.bf16.gmra.mrb[0].mxu0 %v326
    %v479 = vpop.f32.mrb[0].mxu0
    %v480 = vadd.f32 %v318, %v479
    %v481 = vpop.f32.mrb[0].mxu0
    %v482 = vadd.f32 %v322, %v481
    %v483 = vpop.f32.mrb[0].mxu0
    %v484 = vpop.f32.mrb[0].mxu0
    %485 = vdwg.mxu0
    %v486 = vmax.f32 %v470, 0.0
    %v487 = vmax.f32 %v472, 0.0
    %v488 = vmax.f32 %v474, 0.0
    %v489 = vmax.f32 %v476, 0.0
    %v490 = vmax.f32 %v480, 0.0
    %v491 = vmax.f32 %v482, 0.0
    %v492 = vpack.c.bf16 0.0, %v486
    %v493 = vpack.c.bf16 0.0, %v487
    %v494 = vpack.c.bf16 %v488, 0.0
    %v495 = vpack.c.bf16 %v489, 0.0
    %v496 = vpack.c.bf16 %v490, %v490
    %v497 = vpack.c.bf16 %v491, %v491
    %v594 = vunpack.c.l.b16 %v108
    %v595 = vunpack.c.l.b16 %v109
    %v596 = vunpack.c.l.b16 %v110
    %v597 = vunpack.c.l.b16 %v111
    %v598 = vunpack.c.l.b16 %v112
    %v599 = vunpack.c.l.b16 %v113
    %v600 = vunpack.c.l.b16 %v114
    %v601 = vunpack.c.l.b16 %v115
    %v602 = vunpack.c.l.b16 %v116
    %v603 = vunpack.c.l.b16 %v117
    %v604 = vunpack.c.l.b16 %v118
    %v605 = vunpack.c.l.b16 %v119
    %v606 = vunpack.c.l.b16 %v120
    %v607 = vunpack.c.l.b16 %v121
    %v608 = vunpack.c.l.b16 %v122
    %v609 = vunpack.c.l.b16 %v123
    %v610 = vunpack.c.l.b16 %v124
    %v611 = vunpack.c.l.b16 %v125
    %v612 = vunpack.c.l.b16 %v126
    %v613 = vunpack.c.l.b16 %v127
    %v614 = vunpack.c.l.b16 %v128
    %v615 = vunpack.c.l.b16 %v129
    %v616 = vunpack.c.l.b16 %v130
    %v617 = vunpack.c.l.b16 %v131
    %v618 = vunpack.c.l.b16 %v132
    %v619 = vunpack.c.l.b16 %v133
    %v620 = vunpack.c.l.b16 %v134
    %v621 = vunpack.c.l.b16 %v135
    %v622 = vunpack.c.l.b16 %v136
    %v623 = vunpack.c.l.b16 %v137
    %v624 = vunpack.c.l.b16 %v138
    %v625 = vunpack.c.l.b16 %v139
    %v626 = vunpack.c.l.b16 %v140
    %v627 = vunpack.c.l.b16 %v141
    %v628 = vunpack.c.l.b16 %v142
    %v629 = vunpack.c.l.b16 %v143
    %v630 = vunpack.c.l.b16 %v144
    %v631 = vunpack.c.l.b16 %v145
    %v632 = vunpack.c.l.b16 %v146
    %v633 = vunpack.c.l.b16 %v147
    %v634 = vunpack.c.l.b16 %v148
    %v635 = vunpack.c.l.b16 %v149
    %v636 = vunpack.c.l.b16 %v150
    %v637 = vunpack.c.l.b16 %v151
    %v638 = vunpack.c.l.b16 %v152
    %v639 = vunpack.c.l.b16 %v153
    %v640 = vunpack.c.l.b16 %v154
    %v641 = vunpack.c.l.b16 %v155
    %v642 = vunpack.c.l.b16 %v156
    %v643 = vunpack.c.l.b16 %v157
    %v644 = vunpack.c.l.b16 %v158
    %v645 = vunpack.c.l.b16 %v159
    %v646 = vunpack.c.l.b16 %v160
    %v647 = vunpack.c.l.b16 %v161
    %v648 = vunpack.c.l.b16 %v162
    %v649 = vunpack.c.l.b16 %v163
    %v650 = vunpack.c.l.b16 %v164
    %v651 = vunpack.c.l.b16 %v165
    %v652 = vunpack.c.l.b16 %v166
    %v653 = vunpack.c.l.b16 %v167
    %v654 = vunpack.c.l.b16 %v168
    %v655 = vunpack.c.l.b16 %v169
    %v656 = vunpack.c.l.b16 %v170
    %v657 = vunpack.c.l.b16 %v171
    %v658 = vunpack.c.l.b16 %v172
    %v659 = vunpack.c.l.b16 %v173
    %v660 = vunpack.c.l.b16 %v174
    %v661 = vunpack.c.l.b16 %v175
    %v662 = vunpack.c.l.b16 %v176
    %v663 = vunpack.c.l.b16 %v177
    %v664 = vunpack.c.l.b16 %v178
    %v665 = vunpack.c.l.b16 %v179
    %v666 = vunpack.c.l.b16 %v180
    %v667 = vunpack.c.l.b16 %v181
    %v668 = vunpack.c.l.b16 %v182
    %v669 = vunpack.c.l.b16 %v183
    %v670 = vunpack.c.l.b16 %v184
    %v671 = vunpack.c.l.b16 %v185
    %v672 = vunpack.c.l.b16 %v186
    %v673 = vunpack.c.l.b16 %v187
    %v674 = vunpack.c.l.b16 %v188
    %v675 = vunpack.c.l.b16 %v189
    %v676 = vunpack.c.l.b16 %v190
    %v677 = vunpack.c.l.b16 %v191
    %v678 = vunpack.c.l.b16 %v192
    %v679 = vunpack.c.l.b16 %v193
    %v680 = vunpack.c.l.b16 %v194
    %v681 = vunpack.c.l.b16 %v195
    %v682 = vunpack.c.l.b16 %v196
    %v683 = vunpack.c.l.b16 %v197
    %v684 = vunpack.c.l.b16 %v198
    %v685 = vunpack.c.l.b16 %v199
    %v686 = vunpack.c.l.b16 %v200
    %v687 = vunpack.c.l.b16 %v201
    %v688 = vunpack.c.l.b16 %v202
    %v689 = vunpack.c.l.b16 %v203
    %v690 = vpack.c.b16 %v595, %v594
    %v691 = vpack.c.b16 %v597, %v596
    %v692 = vpack.c.b16 %v599, %v598
    %v693 = vpack.c.b16 %v601, %v600
    %v694 = vpack.c.b16 %v603, %v602
    %v695 = vpack.c.b16 %v605, %v604
    %v696 = vpack.c.b16 %v607, %v606
    %v697 = vpack.c.b16 %v609, %v608
    %v698 = vpack.c.b16 %v611, %v610
    %v699 = vpack.c.b16 %v613, %v612
    %v700 = vpack.c.b16 %v615, %v614
    %v701 = vpack.c.b16 %v617, %v616
    %v702 = vpack.c.b16 %v619, %v618
    %v703 = vpack.c.b16 %v621, %v620
    %v704 = vpack.c.b16 %v623, %v622
    %v705 = vpack.c.b16 %v625, %v624
    %v706 = vpack.c.b16 %v627, %v626
    %v707 = vpack.c.b16 %v629, %v628
    %v708 = vpack.c.b16 %v631, %v630
    %v709 = vpack.c.b16 %v633, %v632
    %v710 = vpack.c.b16 %v635, %v634
    %v711 = vpack.c.b16 %v637, %v636
    %v712 = vpack.c.b16 %v639, %v638
    %v713 = vpack.c.b16 %v641, %v640
    %v714 = vpack.c.b16 %v643, %v642
    %v715 = vpack.c.b16 %v645, %v644
    %v716 = vpack.c.b16 %v647, %v646
    %v717 = vpack.c.b16 %v649, %v648
    %v718 = vpack.c.b16 %v651, %v650
    %v719 = vpack.c.b16 %v653, %v652
    %v720 = vpack.c.b16 %v655, %v654
    %v721 = vpack.c.b16 %v657, %v656
    %v722 = vpack.c.b16 %v659, %v658
    %v723 = vpack.c.b16 %v661, %v660
    %v724 = vpack.c.b16 %v663, %v662
    %v725 = vpack.c.b16 %v665, %v664
    %v726 = vpack.c.b16 %v667, %v666
    %v727 = vpack.c.b16 %v669, %v668
    %v728 = vpack.c.b16 %v671, %v670
    %v729 = vpack.c.b16 %v673, %v672
    %v730 = vpack.c.b16 %v675, %v674
    %v731 = vpack.c.b16 %v677, %v676
    %v732 = vpack.c.b16 %v679, %v678
    %v733 = vpack.c.b16 %v681, %v680
    %v734 = vpack.c.b16 %v683, %v682
    %v735 = vpack.c.b16 %v685, %v684
    %v736 = vpack.c.b16 %v687, %v686
    %v737 = vpack.c.b16 %v689, %v688
    %786 = vmatprep.subr.bf16.mxu0 0
    %787 = vmatpush1.bf16.msra.mxu0 %v690
    %788 = vmatprep.subr.bf16.mxu0 0
    %789 = vmatpush1.bf16.msra.mxu0 %v691
    %790 = vmatprep.subr.bf16.mxu0 0
    %791 = vmatpush1.bf16.msra.mxu0 %v692
    %792 = vmatprep.subr.bf16.mxu0 0
    %793 = vmatpush1.bf16.msra.mxu0 %v693
    %794 = vmatprep.subr.bf16.mxu0 0
    %795 = vmatpush1.bf16.msra.mxu0 %v694
    %796 = vmatprep.subr.bf16.mxu0 0
    %797 = vmatpush1.bf16.msra.mxu0 %v695
    %798 = vmatprep.subr.bf16.mxu0 0
    %799 = vmatpush1.bf16.msra.mxu0 %v696
    %800 = vmatprep.subr.bf16.mxu0 0
    %801 = vmatpush1.bf16.msra.mxu0 %v697
    %802 = vmatprep.subr.bf16.mxu0 0
    %803 = vmatpush1.bf16.msra.mxu0 %v698
    %804 = vmatprep.subr.bf16.mxu0 0
    %805 = vmatpush1.bf16.msra.mxu0 %v699
    %806 = vmatprep.subr.bf16.mxu0 0
    %807 = vmatpush1.bf16.msra.mxu0 %v700
    %808 = vmatprep.subr.bf16.mxu0 0
    %809 = vmatpush1.bf16.msra.mxu0 %v701
    %810 = vmatprep.subr.bf16.mxu0 0
    %811 = vmatpush1.bf16.msra.mxu0 %v702
    %812 = vmatprep.subr.bf16.mxu0 0
    %813 = vmatpush1.bf16.msra.mxu0 %v703
    %814 = vmatprep.subr.bf16.mxu0 0
    %815 = vmatpush1.bf16.msra.mxu0 %v704
    %816 = vmatprep.subr.bf16.mxu0 0
    %817 = vmatpush1.bf16.msra.mxu0 %v705
    %818 = vmatprep.mubr.bf16.mxu0 %v493
    %819 = vmatmul.mubr.bf16.gmra.mrb[0].mxu0 %v492
    %v820 = vpop.f32.mrb[0].mxu0
    %v821 = vadd.f32 %v225, %v820
    %v822 = vpop.f32.mrb[0].mxu0
    %v823 = vpop.f32.mrb[0].mxu0
    %v824 = vadd.f32 %v226, %v823
    %v825 = vpop.f32.mrb[0].mxu0
    %826 = vmatprep.mubr.bf16.mxu0 %v326
    %827 = vmatmul.mubr.bf16.gmra.mrb[0].mxu0 %v326
    %v828 = vpop.f32.mrb[0].mxu0
    %v829 = vadd.f32 %v227, %v828
    %v830 = vpop.f32.mrb[0].mxu0
    %v831 = vpop.f32.mrb[0].mxu0
    %v832 = vpop.f32.mrb[0].mxu0
    %833 = vdwg.mxu0
    %834 = vmatprep.subr.bf16.mxu0 0
    %835 = vmatpush1.bf16.msra.mxu0 %v706
    %836 = vmatprep.subr.bf16.mxu0 0
    %837 = vmatpush1.bf16.msra.mxu0 %v707
    %838 = vmatprep.subr.bf16.mxu0 0
    %839 = vmatpush1.bf16.msra.mxu0 %v708
    %840 = vmatprep.subr.bf16.mxu0 0
    %841 = vmatpush1.bf16.msra.mxu0 %v709
    %842 = vmatprep.subr.bf16.mxu0 0
    %843 = vmatpush1.bf16.msra.mxu0 %v710
    %844 = vmatprep.subr.bf16.mxu0 0
    %845 = vmatpush1.bf16.msra.mxu0 %v711
    %846 = vmatprep.subr.bf16.mxu0 0
    %847 = vmatpush1.bf16.msra.mxu0 %v712
    %848 = vmatprep.subr.bf16.mxu0 0
    %849 = vmatpush1.bf16.msra.mxu0 %v713
    %850 = vmatprep.subr.bf16.mxu0 0
    %851 = vmatpush1.bf16.msra.mxu0 %v714
    %852 = vmatprep.subr.bf16.mxu0 0
    %853 = vmatpush1.bf16.msra.mxu0 %v715
    %854 = vmatprep.subr.bf16.mxu0 0
    %855 = vmatpush1.bf16.msra.mxu0 %v716
    %856 = vmatprep.subr.bf16.mxu0 0
    %857 = vmatpush1.bf16.msra.mxu0 %v717
    %858 = vmatprep.subr.bf16.mxu0 0
    %859 = vmatpush1.bf16.msra.mxu0 %v718
    %860 = vmatprep.subr.bf16.mxu0 0
    %861 = vmatpush1.bf16.msra.mxu0 %v719
    %862 = vmatprep.subr.bf16.mxu0 0
    %863 = vmatpush1.bf16.msra.mxu0 %v720
    %864 = vmatprep.subr.bf16.mxu0 0
    %865 = vmatpush1.bf16.msra.mxu0 %v721
    %866 = vmatprep.mubr.bf16.mxu0 %v495
    %867 = vmatmul.mubr.bf16.gmra.mrb[0].mxu0 %v494
    %v868 = vpop.f32.mrb[0].mxu0
    %v869 = vadd.f32 %v821, %v868
    %v870 = vpop.f32.mrb[0].mxu0
    %v871 = vpop.f32.mrb[0].mxu0
    %v872 = vadd.f32 %v824, %v871
    %v873 = vpop.f32.mrb[0].mxu0
    %874 = vmatprep.mubr.bf16.mxu0 %v326
    %875 = vmatmul.mubr.bf16.gmra.mrb[0].mxu0 %v326
    %v876 = vpop.f32.mrb[0].mxu0
    %v877 = vadd.f32 %v829, %v876
    %v878 = vpop.f32.mrb[0].mxu0
    %v879 = vpop.f32.mrb[0].mxu0
    %v880 = vpop.f32.mrb[0].mxu0
    %881 = vdwg.mxu0
    %882 = vmatprep.subr.bf16.mxu0 0
    %883 = vmatpush1.bf16.msra.mxu0 %v722
    %884 = vmatprep.subr.bf16.mxu0 0
    %885 = vmatpush1.bf16.msra.mxu0 %v723
    %886 = vmatprep.subr.bf16.mxu0 0
    %887 = vmatpush1.bf16.msra.mxu0 %v724
    %888 = vmatprep.subr.bf16.mxu0 0
    %889 = vmatpush1.bf16.msra.mxu0 %v725
    %890 = vmatprep.subr.bf16.mxu0 0
    %891 = vmatpush1.bf16.msra.mxu0 %v726
    %892 = vmatprep.subr.bf16.mxu0 0
    %893 = vmatpush1.bf16.msra.mxu0 %v727
    %894 = vmatprep.subr.bf16.mxu0 0
    %895 = vmatpush1.bf16.msra.mxu0 %v728
    %896 = vmatprep.subr.bf16.mxu0 0
    %897 = vmatpush1.bf16.msra.mxu0 %v729
    %898 = vmatprep.subr.bf16.mxu0 0
    %899 = vmatpush1.bf16.msra.mxu0 %v730
    %900 = vmatprep.subr.bf16.mxu0 0
    %901 = vmatpush1.bf16.msra.mxu0 %v731
    %902 = vmatprep.subr.bf16.mxu0 0
    %903 = vmatpush1.bf16.msra.mxu0 %v732
    %904 = vmatprep.subr.bf16.mxu0 0
    %905 = vmatpush1.bf16.msra.mxu0 %v733
    %906 = vmatprep.subr.bf16.mxu0 0
    %907 = vmatpush1.bf16.msra.mxu0 %v734
    %908 = vmatprep.subr.bf16.mxu0 0
    %909 = vmatpush1.bf16.msra.mxu0 %v735
    %910 = vmatprep.subr.bf16.mxu0 0
    %911 = vmatpush1.bf16.msra.mxu0 %v736
    %912 = vmatprep.subr.bf16.mxu0 0
    %913 = vmatpush1.bf16.msra.mxu0 %v737
    %914 = vmatprep.mubr.bf16.mxu0 %v326
    %915 = vmatmul.mubr.bf16.gmra.mrb[0].mxu0 %v326
    %v916 = vpop.f32.mrb[0].mxu0
    %v917 = vadd.f32 %v869, %v916
    %v918 = vpop.f32.mrb[0].mxu0
    %v919 = vpop.f32.mrb[0].mxu0
    %v920 = vadd.f32 %v872, %v919
    %v921 = vpop.f32.mrb[0].mxu0
    %922 = vmatprep.mubr.bf16.mxu0 %v497
    %923 = vmatmul.mubr.bf16.gmra.mrb[0].mxu0 %v496
    %v924 = vpop.f32.mrb[0].mxu0
    %v925 = vadd.f32 %v877, %v924
    %v926 = vpop.f32.mrb[0].mxu0
    %v927 = vpop.f32.mrb[0].mxu0
    %v928 = vpop.f32.mrb[0].mxu0
    %929 = vdwg.mxu0
    %v930 = vmax.f32 %v917, 0.0
    %v931 = vmax.f32 %v920, 0.0
    %v932 = vmax.f32 %v925, 0.0
    %v933 = vpack.c.bf16 %v931, %v930
    %v934 = vpack.c.bf16 %v932, %v932
    %v951 = vunpack.c.l.b16 %v204
    %v952 = vunpack.c.l.b16 %v205
    %v953 = vunpack.c.l.b16 %v206
    %v954 = vunpack.c.l.b16 %v207
    %v955 = vunpack.c.l.b16 %v208
    %v956 = vunpack.c.l.b16 %v209
    %v957 = vunpack.c.l.b16 %v210
    %v958 = vunpack.c.l.b16 %v211
    %v959 = vunpack.c.l.b16 %v212
    %v960 = vunpack.c.l.b16 %v213
    %v961 = vunpack.c.l.b16 %v214
    %v962 = vunpack.c.l.b16 %v215
    %v963 = vunpack.c.l.b16 %v216
    %v964 = vunpack.c.l.b16 %v217
    %v965 = vunpack.c.l.b16 %v218
    %v966 = vunpack.c.l.b16 %v219
    %v967 = vpack.c.b16 %v952, %v951
    %v968 = vpack.c.b16 %v954, %v953
    %v969 = vpack.c.b16 %v956, %v955
    %v970 = vpack.c.b16 %v958, %v957
    %v971 = vpack.c.b16 %v960, %v959
    %v972 = vpack.c.b16 %v962, %v961
    %v973 = vpack.c.b16 %v964, %v963
    %v974 = vpack.c.b16 %v966, %v965
    %983 = vmatprep.subr.bf16.mxu0 0
    %984 = vmatpush1.bf16.msra.mxu0 %v967
    %985 = vmatprep.subr.bf16.mxu0 0
    %986 = vmatpush1.bf16.msra.mxu0 %v968
    %987 = vmatprep.subr.bf16.mxu0 0
    %988 = vmatpush1.bf16.msra.mxu0 %v969
    %989 = vmatprep.subr.bf16.mxu0 0
    %990 = vmatpush1.bf16.msra.mxu0 %v970
    %991 = vmatprep.subr.bf16.mxu0 0
    %992 = vmatpush1.bf16.msra.mxu0 %v971
    %993 = vmatprep.subr.bf16.mxu0 0
    %994 = vmatpush1.bf16.msra.mxu0 %v972
    %995 = vmatprep.subr.bf16.mxu0 0
    %996 = vmatpush1.bf16.msra.mxu0 %v973
    %997 = vmatprep.subr.bf16.mxu0 0
    %998 = vmatpush1.bf16.msra.mxu0 %v974
    %999 = vmatprep.subr.bf16.mxu0 0
    %1000 = vmatpush1.bf16.msra.mxu0 0
    %1001 = vmatprep.subr.bf16.mxu0 0
    %1002 = vmatpush1.bf16.msra.mxu0 0
    %1003 = vmatprep.subr.bf16.mxu0 0
    %1004 = vmatpush1.bf16.msra.mxu0 0
    %1005 = vmatprep.subr.bf16.mxu0 0
    %1006 = vmatpush1.bf16.msra.mxu0 0
    %1007 = vmatprep.subr.bf16.mxu0 0
    %1008 = vmatpush1.bf16.msra.mxu0 0
    %1009 = vmatprep.subr.bf16.mxu0 0
    %1010 = vmatpush1.bf16.msra.mxu0 0
    %1011 = vmatprep.subr.bf16.mxu0 0
    %1012 = vmatpush1.bf16.msra.mxu0 0
    %1013 = vmatprep.subr.bf16.mxu0 0
    %1014 = vmatpush1.bf16.msra.mxu0 0
    %1015 = vmatprep.mubr.bf16.mxu0 0
    %1016 = vmatmul.mubr.bf16.gmra.mrb[0].mxu0 %v933
    %v1017 = vpop.f32.mrb[0].mxu0
    %v1018 = vadd.f32 %v228, %v1017
    %v1019 = vpop.f32.mrb[0].mxu0
    %v1020 = vpop.f32.mrb[0].mxu0
    %v1021 = vadd.f32 %v228, %v1020
    %v1022 = vpop.f32.mrb[0].mxu0
    %1023 = vmatprep.mubr.bf16.mxu0 0
    %1024 = vmatmul.mubr.bf16.gmra.mrb[0].mxu0 %v934
    %v1025 = vpop.f32.mrb[0].mxu0
    %v1026 = vadd.f32 %v228, %v1025
    %v1027 = vpop.f32.mrb[0].mxu0
    %v1028 = vpop.f32.mrb[0].mxu0
    %v1029 = vpop.f32.mrb[0].mxu0
    %1030 = vdwg.mxu0
    %v1031 = vmul.f32 %v1018, 0.5
    %v1032 = vmul.f32 %v1021, 0.5
    %v1033 = vmul.f32 %v1026, 0.5
    %v1034 = vtanh.pop %v1031
    %v1035 = vtanh.pop %v1032
    %v1036 = vtanh.pop %v1033
    %v1037 = vmul.f32 %v1034, 0.5
    %v1038 = vmul.f32 %v1035, 0.5
    %v1039 = vmul.f32 %v1036, 0.5
    %v1040 = vadd.f32 %v1037, 0.5
    %v1041 = vadd.f32 %v1038, 0.5
    %v1042 = vadd.f32 %v1039, 0.5
    %1044 = vset.pattern.permute.xlu0 32
    %1045 = vperm.xlu0 %1044, %v229
    %v1046 = vpop.permute.xlu0 %1045
    %v1048 = vmul.f32 %v1040, %v1046
    %1049 = vset.pattern.permute.xlu0 33
    %1050 = vperm.xlu0 %1049, %v229
    %v1051 = vpop.permute.xlu0 %1050
    %v1053 = vmul.f32 %v1042, %v1051
    %1055 = vrot.lane.b32.xlu0 %v1053, 122
    %v1056 = vpop.permute.xlu0 %1055
    %v1058 = vadd.f32 %v1048, %v1056
    %1059 = vset.pattern.permute.xlu0 34
    %1060 = vperm.xlu0 %1059, %v229
    %v1061 = vpop.permute.xlu0 %1060
    %v1063 = vmul.f32 %v1041, %v1061
    %1065 = vrot.lane.b32.xlu0 %v1063, 125
    %v1066 = vpop.permute.xlu0 %1065
    %v1068 = vadd.f32 %v1058, %v1066
    %vm1069 = vcmask 23552
    %1070 = vst.msk [vmem:[%s6] sm:$0xff] %vm1069, %v1068
    // Predicated region
    $region46: #{rgb_prediction_forward.1} parent=1 // pred_check
      _
    $region47: #{rgb_prediction_forward.1} parent=1 // pred_check_branch
      %1072 = sbr.rel (0) target = $region49
    $region48: #{rgb_prediction_forward.1} parent=1 // pred_region
      _
    $region49: #{rgb_prediction_forward.1} parent=1 // pred_fallthru
      _
    // Predicated region
    $region50: #{rgb_prediction_forward.1} parent=1 // pred_check
      _
    $region51: #{rgb_prediction_forward.1} parent=1 // pred_check_branch
      %1074 = sbr.rel (0) target = $region53
    $region52: #{rgb_prediction_forward.1} parent=1 // pred_region
      _
    $region53: #{rgb_prediction_forward.1} parent=1 // pred_fallthru
      _
    %1075 = vsyncpa [#allocation3], 1
    %1076 = vsyncpa [#allocation5], 1
    %1077 = vsyncpa [#allocation8], 1

</llo_original>
